<compile_context>
chip_gen: v7x
topology: tpu7x:2x2x1
jax: 0.10.0
libtpu: 0.0.40
codegen_flags: <defaults>
</compile_context>

<pallas_src>
import math

import numpy as np
import jax
import jax.numpy as jnp
from jax.experimental import pallas as pl
from jax.experimental.pallas import tpu as pltpu


def _sinusoidal_pos_emb_kernel(x_ref, table_ref, out_ref):
    # x_ref:     (TB, L) f32  -- each timestep repeated `dim` times along lanes
    # table_ref: (2, L)  f32  -- row 0: frequencies (dim-table tiled `fold` times)
    #                            row 1: phases (0 for the sin half, pi/2 for the cos half)
    # out_ref:   (TB, L)      -- lane-dense embedding tile
    theta = x_ref[...] * table_ref[0:1, :] + table_ref[1:2, :]   # VPU only
    # TODO(synk): if a bundle dump shows jnp.sin lowering to a long VPU polynomial and
    # VALU becomes the binder with bf16 output, switch to a bounded-range sin (|theta|<~1e4).
    out_ref[...] = jnp.sin(theta).astype(out_ref.dtype)          # one EUP stream, one lane-dense store


def _round_up(x: int, m: int) -> int:
    return (x + m - 1) // m * m


def sinusoidal_pos_emb(x: jax.Array, dim: int, *, out_dtype=jnp.float32,
                       target_tile_bytes: int = 4 << 20) -> jax.Array:
    """Pallas TPU implementation of SinusoidalPosEmb(dim).forward(x).

    x:   (B,) float timesteps
    out: (B, dim) embedding, [sin(x*f) | cos(x*f)] along the last dim.
    """
    assert dim % 2 == 0, "dim must be even (module concatenates sin|cos halves)"
    half_dim = dim // 2
    assert half_dim >= 2, "dim must be >= 4 so that (half_dim - 1) > 0"
    b = x.shape[0]

    # ---- lane-dense folding: pack `fold` batch rows per 128-lane output row ------------
    if dim % 128 == 0:
        fold = 1
    elif 128 % dim == 0:
        fold = 128 // dim
    else:
        fold = 1          # unaligned dim: correctness fallback (masked stores)
    lane_dim = dim * fold

    # ---- O(dim) table precompute in numpy (zero exp() inside the kernel) ---------------
    emb_scale = math.log(10000.0) / (half_dim - 1)
    freqs_half = np.exp(np.arange(half_dim, dtype=np.float32) * (-emb_scale))
    freq_dim = np.concatenate([freqs_half, freqs_half])
    phase_dim = np.concatenate([np.zeros(half_dim, np.float32),
                                np.full(half_dim, 0.5 * math.pi, np.float32)])
    table = jnp.asarray(np.stack([np.tile(freq_dim, fold),
                                  np.tile(phase_dim, fold)]))       # (2, lane_dim) f32

    # ---- group timesteps so both the kernel input and output are lane-dense ------------
    b_pad = _round_up(b, fold)
    xf = x.astype(jnp.float32)
    if b_pad != b:
        xf = jnp.pad(xf, (0, b_pad - b))
    rows = b_pad // fold
    # Row-major regroup: x_grouped[r, k*dim + j] == x[r*fold + k]   (cheap, fused by XLA)
    x_grouped = jnp.repeat(xf, dim).reshape(rows, lane_dim)

    # ---- row tiling: ~target_tile_bytes per output tile; >=2 grid steps when possible --
    budget_rows = max(8, (target_tile_bytes // (lane_dim * 4)) // 8 * 8)
    if rows <= 8:
        tb_rows = rows                                  # single block == full array dims
    else:
        two_step = _round_up(pl.cdiv(rows, 2), 8)       # lets v7x's 2 TensorCores both get work
        tb_rows = min(budget_rows, two_step)
    grid = (pl.cdiv(rows, tb_rows),)                    # unpadded out_shape, trailing block masked

    # ---- VMEM budget: double-buffered x + out tiles + table, with headroom -------------
    lane_pad = _round_up(lane_dim, 128)
    sub_pad = _round_up(tb_rows, 8)
    tile_bytes = sub_pad * lane_pad * (4 + np.dtype(out_dtype).itemsize)   # one x + one out tile
    vmem_limit = int(min(48 << 20, max(8 << 20, 3 * tile_bytes)))          # v7x-safe (64 MiB phys)

    out = pl.pallas_call(
        _sinusoidal_pos_emb_kernel,
        out_shape=jax.ShapeDtypeStruct((rows, lane_dim), out_dtype),
        grid=grid,
        in_specs=[
            pl.BlockSpec((tb_rows, lane_dim), lambda i: (i, 0)),   # grouped timesteps
            pl.BlockSpec((2, lane_dim), lambda i: (0, 0)),         # freq/phase table (resident)
        ],
        out_specs=pl.BlockSpec((tb_rows, lane_dim), lambda i: (i, 0)),
        compiler_params=pltpu.CompilerParams(
            dimension_semantics=("parallel",),
            vmem_limit_bytes=vmem_limit),
    )(x_grouped, table)

    # Free row-major reshape back to (b_pad, dim); slice only if b % fold != 0.
    out = out.reshape(b_pad, dim)
    if b_pad != b:
        out = out[:b]
    return out


def sinusoidal_pos_emb_ref(x: jax.Array, dim: int) -> jax.Array:
    """Pure-JAX reference mirroring the PyTorch module."""
    half_dim = dim // 2
    emb = math.log(10000.0) / (half_dim - 1)
    emb = jnp.exp(jnp.arange(half_dim, dtype=jnp.float32) * -emb)
    emb = x.astype(jnp.float32)[:, None] * emb[None, :]
    return jnp.concatenate([jnp.sin(emb), jnp.cos(emb)], axis=-1)


if __name__ == "__main__":
    key = jax.random.PRNGKey(0)
    batch = 8
    dim = 32   # half_dim = 16; fold = 4 -> kernel output is a lane-dense (2, 128) array

    # Deterministic example timesteps (diffusion steps as floats in [0, 1000)).
    t = jax.random.uniform(key, (batch,), dtype=jnp.float32, minval=0.0, maxval=1000.0)

    out = sinusoidal_pos_emb(t, dim)
    out = jax.block_until_ready(out)

    ref = sinusoidal_pos_emb_ref(t, dim)
    assert out.shape == (batch, dim), out.shape
    # cos(theta) computed as sin(theta + pi/2): ~3e-5 abs error at theta ~ 1e3 (f32 ulp).
    assert jnp.allclose(out, ref, atol=1e-4, rtol=1e-5), "mismatch vs reference"

    print("KERNEL_OK")
</pallas_src>

<mosaic_0001>
module attributes {stable_mosaic.version = 11 : i64} {
  func.func @_sinusoidal_pos_emb_kernel(%arg0: i32, %arg1: memref<2x128xf32, #tpu.memory_space<vmem>>, %arg2: memref<2x128xf32, #tpu.memory_space<vmem>>, %arg3: memref<2x128xf32, #tpu.memory_space<vmem>>) attributes {dimension_semantics = [#tpu.dimension_semantics<parallel>], iteration_bounds = array<i64: 1>, scalar_prefetch = 0 : i64, scratch_operands = 0 : i64, tpu.core_type = #tpu.core_type<tc>, window_params = [{transform_indices = @transform_0, window_bounds = array<i64: 2, 128>}, {pipeline_mode = #tpu.pipeline_mode<synchronous>, transform_indices = @transform_1, window_bounds = array<i64: 2, 128>}, {transform_indices = @transform_2, window_bounds = array<i64: 2, 128>}]} {
    %c0 = arith.constant 0 : index
    %c0_0 = arith.constant 0 : index
    %0 = vector.load %arg1[%c0, %c0_0] : memref<2x128xf32, #tpu.memory_space<vmem>>, vector<2x128xf32>
    %c0_1 = arith.constant 0 : index
    %c0_2 = arith.constant 0 : index
    %1 = vector.load %arg2[%c0_1, %c0_2] : memref<2x128xf32, #tpu.memory_space<vmem>>, vector<1x128xf32>
    %2 = vector.broadcast %1 : vector<1x128xf32> to vector<2x128xf32>
    %3 = arith.mulf %0, %2 : vector<2x128xf32>
    %c1 = arith.constant 1 : index
    %c0_3 = arith.constant 0 : index
    %4 = vector.load %arg2[%c1, %c0_3] : memref<2x128xf32, #tpu.memory_space<vmem>>, vector<1x128xf32>
    %5 = vector.broadcast %4 : vector<1x128xf32> to vector<2x128xf32>
    %6 = arith.addf %3, %5 : vector<2x128xf32>
    %7 = math.sin %6 : vector<2x128xf32>
    %c0_4 = arith.constant 0 : index
    %c0_5 = arith.constant 0 : index
    %8 = vector.load %arg3[%c0_4, %c0_5] : memref<2x128xf32, #tpu.memory_space<vmem>>, vector<2x128xf32>
    tpu.vector_store %arg3[%c0_4, %c0_5], %7 {strides = array<i32>} : memref<2x128xf32, #tpu.memory_space<vmem>>, vector<2x128xf32>,
    return
  }
  func.func @transform_0(%arg0: i32) -> (i32, i32) {
    %c0_i32 = arith.constant 0 : i32
    %c0_i32_0 = arith.constant 0 : i32
    return %arg0, %c0_i32 : i32, i32
  }
  func.func @transform_1(%arg0: i32) -> (i32, i32) {
    %c0_i32 = arith.constant 0 : i32
    %c0_i32_0 = arith.constant 0 : i32
    %c0_i32_1 = arith.constant 0 : i32
    return %c0_i32, %c0_i32_0 : i32, i32
  }
  func.func @transform_2(%arg0: i32) -> (i32, i32) {
    %c0_i32 = arith.constant 0 : i32
    %c0_i32_0 = arith.constant 0 : i32
    return %arg0, %c0_i32 : i32, i32
  }
}

</mosaic_0001>

<llo_original>
// kernel: tpu_custom_call.1
$region0: #{tpu_custom_call.1}
  #allocation0 [shape = 'u32[]', space=smem, size = 0x4, offset = 0x4, fixed_abs, tag = 'smem constant byte address 0x4 - core index']
  #allocation1 [shape = 'u32[144,128]{1,0:T(1,128)}', space=vmem, size = 0x12000, scoped, tag = 'internal scratch']
  %s0 = inlined_call_operand.hbm [shape: f32[2,128], index: 0, kind: input, shape index: {}]
  %s1 = inlined_call_operand.vmem [shape: f32[2,128], index: 1, kind: input, shape index: {}]
  %s2 = inlined_call_operand.hbm [shape: f32[2,128], index: 2, kind: output, shape index: {}]
  %s3 = sld [smem:[#allocation0]]
  $region22: #{tpu_custom_call.1} parent=0
    _
  %s5 = ssub.s32 1, %s3
  %s6 = scalar_select 0, %s5, %s3
  $region1: #{tpu_custom_call.1} parent=0
    #allocation2 [shape = 'u8[1024]{0}', space=vmem, size = 0x400, scoped, tag = 'input window, operand 0, single buffered']
    #allocation3 [shape = 's32[1]{0}', space=sflag, size = 0x4, scoped, tag = 'scoped memory for tpu_custom_call.1']
    #allocation4 [shape = 's32[1]{0}', space=sflag, size = 0x4, scoped, tag = 'scoped memory for tpu_custom_call.1']
    #allocation5 [shape = 'u8[1024]{0}', space=vmem, size = 0x400, scoped, tag = 'output window, operand 0, single buffered']
    %7 = vsyncpa [#allocation3], 0
    %8 = vsyncpa [#allocation4], 0
    // Predicated region
    $region2: #{tpu_custom_call.1} parent=1 // pred_check
      _
    $region3: #{tpu_custom_call.1} parent=1 // pred_check_branch
      %10 = sbr.rel (0) target = $region5
    $region4: #{tpu_custom_call.1} parent=1 // pred_region
      %s12 = ssub.s32 32, 32
      %13 = vsyncadd [#allocation3], %s12
      %s15 = sshll.u32 [#allocation2], 4
      %s16 = int_to_ptr.vmem [resolvable:$true] %s15
      %18 = dma.hbm_to_vmem [thread:$0]  %s0, 32, %s16, [#allocation3]
    $region5: #{tpu_custom_call.1} parent=1 // pred_fallthru
      _
    // Predicated region
    $region6: #{tpu_custom_call.1} parent=1 // pred_check
      _
    $region7: #{tpu_custom_call.1} parent=1 // pred_check_branch
      %20 = sbr.rel (0) target = $region9
    $region8: #{tpu_custom_call.1} parent=1 // pred_region
      _
    $region9: #{tpu_custom_call.1} parent=1 // pred_fallthru
      _
    // Predicated region
    $region10: #{tpu_custom_call.1} parent=1 // pred_check
      _
    $region11: #{tpu_custom_call.1} parent=1 // pred_check_branch
      %22 = sbr.rel (0) target = $region13
    $region12: #{tpu_custom_call.1} parent=1 // pred_region
      %23 = dma.done [#allocation3], 32
    $region13: #{tpu_custom_call.1} parent=1 // pred_fallthru
      _
    %v24 = vld [vmem:[#allocation2] sm:$0x3]
    %v25 = vld [vmem:[%s1] sm:$0x1]
    %v26 = vlaneseq
    %v27 = vshrl.u32 %v26, 7
    %v28 = vsub.s32 0, %v27
    %v29 = vrot.slane %v25, %v28
    %v30 = vmul.f32 %v24, %v29
    %v31 = vld [vmem:[%s1 + $0x1] sm:$0x1]
    %v32 = vlaneseq
    %v33 = vshrl.u32 %v32, 7
    %v34 = vsub.s32 0, %v33
    %v35 = vrot.slane %v31, %v34
    %v36 = vadd.f32 %v30, %v35
    %v37 = vand.u32 2147483647, %v36
    %vm38 = vcmp.le.f32.partialorder %v37, 0.7853982
    %vm39 = vcmp.lt.s32.totalorder %v36, 0
    %v40 = vand.u32 %v36, 2139095040
    %v41 = vshrl.u32 %v40, 23
    %v42 = vsub.s32 %v41, 127
    %v43 = vand.u32 2147483647, %v36
    %v44 = vand.u32 %v43, 8388607
    %v45 = vor.u32 %v44, 8388608
    %v46 = vsub.s32 0, %v45
    %v47 = vadd.s32 %v42, 1
    %vm48 = vcmp.gt.s32.totalorder %v47, 0
    %v49 = vsel %vm48, %v47, 0
    %v50 = vshrl.u32 %v49, 5
    %v51 = vand.u32 %v49, 31
    %v52 = vsub.s32 32, %v51
    %v53 = vshrl.u32 683565275, %v52
    %v54 = vshll.u32 683565275, %v51
    %v55 = vshrl.u32 2475754826, %v52
    %v56 = vor.u32 %v54, %v55
    %v57 = vshll.u32 2475754826, %v51
    %v58 = vshrl.u32 2131351028, %v52
    %v59 = vor.u32 %v57, %v58
    %v60 = vshll.u32 2131351028, %v51
    %v61 = vshrl.u32 2102212464, %v52
    %v62 = vor.u32 %v60, %v61
    %v63 = vshll.u32 2102212464, %v51
    %v64 = vshrl.u32 920167782, %v52
    %v65 = vor.u32 %v63, %v64
    %v66 = vshll.u32 920167782, %v51
    %v67 = vshrl.u32 1326507024, %v52
    %v68 = vor.u32 %v66, %v67
    %vm69 = vcmp.lt.s32.totalorder %v50, 1
    %vm70 = vcmp.lt.s32.totalorder %v50, 2
    %vm71 = vcmp.lt.s32.totalorder %v50, 3
    %vm72 = vcmp.lt.s32.totalorder %v50, 4
    %v73 = vsel %vm69, %v53, %v56
    %v74 = vsel %vm72, %v62, 2102212464
    %v75 = vsel %vm71, %v59, %v74
    %v76 = vsel %vm70, %v73, %v75
    %v77 = vsel %vm69, %v56, %v59
    %v78 = vsel %vm72, %v65, 920167782
    %v79 = vsel %vm71, %v62, %v78
    %v80 = vsel %vm70, %v77, %v79
    %v81 = vsel %vm69, %v59, %v62
    %v82 = vsel %vm72, %v68, 1326507024
    %v83 = vsel %vm71, %v65, %v82
    %v84 = vsel %vm70, %v81, %v83
    %v85 = vshll.u32 %v45, 8
    %v86 = vmul.u32.u64.compose %v85, %v84
    %v87 = vextract.low.u32 %v86
    %v88 = vextract.high.u32 %v86
    %v89 = vmul.u32.u64.compose %v85, %v80
    %v90 = vextract.low.u32 %v89
    %v91 = vextract.high.u32 %v89
    %v92 = vmul.u32 %v85, %v76
    %v93 = vadd.s32 %v88, %v90
    %vm94 = vc.u32 %v88, %v90
    %v95 = vadd.s32 %v91, 1
    %v96 = vsel %vm94, %v95, %v91
    %v97 = vadd.s32 %v92, %v96
    %v98 = vadd.s32 %v97, 536870912
    %v99 = vshrl.u32 %v98, 30
    %v100 = vshll.u32 %v99, 30
    %v101 = vsub.s32 %v97, %v100
    %vm102 = vcmp.lt.s32.totalorder %v101, 0
    %v103 = vsub.s32 0, %v101
    %v104 = vsel %vm102, %v103, %v101
    %v105 = vclz %v104
    %v106 = vsub.s32 %v105, 2
    %vm107 = vcmp.gt.s32.totalorder 0, %v106
    %v108 = vsel %vm107, 0, %v106
    %v109 = vsub.s32 32, %v108
    %v110 = vshll.u32 %v101, %v108
    %v111 = vshrl.u32 %v93, %v109
    %v112 = vor.u32 %v110, %v111
    %v113 = vsub.s32 4294967266, %v108
    %v114 = vadd.s32 %v113, 127
    %v115 = vshll.u32 %v114, 23
    %v116 = vor.u32 4788187, %v115
    %v117 = vand.u32 2147483647, %v116
    %v119 = vcvt.s32.f32 %v112
    %v120 = vmul.f32 %v119, %v117
    %v121 = vxor.u32 %v120, 2147483648
    %v122 = vsel %vm39, %v121, %v120
    %v123 = vsub.s32 4, %v99
    %v124 = vsel %vm39, %v123, %v99
    %v125 = vsel %vm38, %v36, %v122
    %v126 = vsel %vm38, 0, %v124
    %v127 = vcosq.f32.pop %v125
    %v128 = vsinq.f32.pop %v125
    %vm129 = vweird.f32 %v36
    %v130 = vadd.s32 %v126, 3
    %v131 = vand.u32 %v130, 3
    %vm132 = vcmp.lt.s32.totalorder %v131, 2
    %vm133 = vcmp.eq.s32.totalorder %v131, 0
    %v134 = vxor.u32 %v128, 2147483648
    %v135 = vsel %vm133, %v127, %v134
    %vm136 = vcmp.eq.s32.totalorder %v131, 2
    %v137 = vxor.u32 %v127, 2147483648
    %v138 = vsel %vm136, %v137, %v128
    %v139 = vsel %vm132, %v135, %v138
    %v140 = vsel %vm129, nan, %v139
    %141 = vst [vmem:[#allocation5] sm:$0x3] %v140
    // Predicated region
    $region14: #{tpu_custom_call.1} parent=1 // pred_check
      _
    $region15: #{tpu_custom_call.1} parent=1 // pred_check_branch
      %143 = sbr.rel (0) target = $region17
    $region16: #{tpu_custom_call.1} parent=1 // pred_region
      %s145 = ssub.s32 32, 32
      %146 = vsyncadd [#allocation4], %s145
      %s148 = sshll.u32 [#allocation5], 4
      %s149 = int_to_ptr.vmem [resolvable:$true] %s148
      %151 = dma.vmem_to_hbm [thread:$0]  %s149, 32, %s2, [#allocation4]
    $region17: #{tpu_custom_call.1} parent=1 // pred_fallthru
      _
    // Predicated region
    $region18: #{tpu_custom_call.1} parent=1 // pred_check
      _
    $region19: #{tpu_custom_call.1} parent=1 // pred_check_branch
      %153 = sbr.rel (0) target = $region21
    $region20: #{tpu_custom_call.1} parent=1 // pred_region
      %154 = dma.done [#allocation4], 32
    $region21: #{tpu_custom_call.1} parent=1 // pred_fallthru
      _
    %155 = vsyncpa [#allocation3], 1
    %156 = vsyncpa [#allocation4], 1

</llo_original>
